<compile_context>
chip_gen: v6e
topology: v6e:2x2x1
jax: 0.10.0
libtpu: 0.0.40
codegen_flags: <defaults>
</compile_context>

<pallas_src>
import functools

import jax
import jax.numpy as jnp
from jax.experimental import pallas as pl
from jax.experimental.pallas import tpu as pltpu


def transr_kernel(src_ref, dst_ref, rel_ref, entT_ref, projS_ref, relT_ref, o_ref,
                  *, nr, rd, lane_chunk):
    # src_ref / dst_ref / rel_ref : (1, tb) int32   index streams (batch on lanes)
    # entT_ref                    : (H, N)          entity table, resident
    # projS_ref                   : (nr*rd, H)      stacked M^T blocks, resident
    # relT_ref                    : (rd, nr)        relation table, resident
    # o_ref                       : (1, tb)         scores (lane-dense store)
    f32 = jnp.float32
    tb = o_ref.shape[1]
    N = entT_ref.shape[1]
    c = lane_chunk

    entT = entT_ref[...]
    projS = projS_ref[...]
    relT = relT_ref[...].astype(f32)          # tiny; keep the rel gather exact

    def compute(start):
        sl = pl.ds(start, c)
        src_i = src_ref[:, sl]                 # (1, c) int32
        dst_i = dst_ref[:, sl]
        rel_i = rel_ref[:, sl]

        # In-VMEM entity gather: one-hot node selectors -> two MXU matmuls.
        iota_n = jax.lax.broadcasted_iota(jnp.int32, (N, c), 0)
        oh_src = (iota_n == src_i).astype(entT.dtype)            # (N, c)
        oh_dst = (iota_n == dst_i).astype(entT.dtype)
        src_e = jnp.dot(entT, oh_src, preferred_element_type=f32)  # (H, c)
        dst_e = jnp.dot(entT, oh_dst, preferred_element_type=f32)  # (H, c)

        # One stacked projection matmul per entity stream:
        #   (nr*rd, H) @ (H, c) -> (nr*rd, c) -> (nr, rd, c)
        ps = jnp.dot(projS, src_e.astype(projS.dtype),
                     preferred_element_type=f32).reshape(nr, rd, c)
        pd = jnp.dot(projS, dst_e.astype(projS.dtype),
                     preferred_element_type=f32).reshape(nr, rd, c)

        # In-kernel relation one-hot (padded lanes carry the sentinel nr -> all
        # zero -> score 0 before being sliced off in the wrapper).
        iota_r = jax.lax.broadcasted_iota(jnp.int32, (nr, c), 0)
        oh_rel = (iota_r == rel_i).astype(f32)                    # (nr, c)
        rel_e = jnp.dot(relT, oh_rel, preferred_element_type=f32)  # (rd, c)

        # Single one-hot-weighted sum over the relation axis (VPU).
        w = oh_rel[:, None, :]                                     # (nr, 1, c)
        src_p = jnp.sum(ps * w, axis=0)                            # (rd, c)
        dst_p = jnp.sum(pd * w, axis=0)

        def l2_normalize(x):
            # F.normalize(p=2, dim=-1): x / max(||x||, 1e-12)
            #                        == x * rsqrt(max(||x||^2, 1e-24))  (EUP rsqrt)
            ss = jnp.sum(x * x, axis=0, keepdims=True)             # (1, c)
            return x * jax.lax.rsqrt(jnp.maximum(ss, 1e-24))

        diff = l2_normalize(src_p) + rel_e - l2_normalize(dst_p)   # (rd, c)
        o_ref[:, sl] = jnp.sqrt(jnp.sum(diff * diff, axis=0, keepdims=True))

    n_chunks = tb // c
    if n_chunks == 1:
        compute(0)
    else:
        # Bound vreg live ranges at wide tiles: loop the epilogue over lane chunks.
        def body(i, carry):
            compute(pl.multiple_of(i * c, c))
            return carry
        jax.lax.fori_loop(0, n_chunks, body, 0, unroll=True)


def transr_forward(src_idx, rel_idx, dst_idx,
                   entity_embedding, relation_embedding, projection_matrix,
                   *, batch_tile=512, table_dtype=jnp.float32):
    """Index/pad plumbing in plain JAX + Pallas scoring kernel (tables VMEM-resident)."""
    B = src_idx.shape[0]
    num_rel, H, Rd = projection_matrix.shape
    num_nodes = entity_embedding.shape[0]
    f32 = jnp.float32

    def rup(x, m):
        return (x + m - 1) // m * m

    # Tile: multiple of 128, as wide as requested, but keep >= 2 grid tiles when
    # B > 128 so the "parallel" axis can shard across v7x's two TensorCores.
    tb = max(128, min(rup(batch_tile, 128), rup(pl.cdiv(B, 2), 128)))
    n_tiles = pl.cdiv(B, tb)
    B_pad = n_tiles * tb
    lane_chunk = 256 if tb % 256 == 0 else 128

    def pad_idx(idx, sentinel):
        idx = idx.astype(jnp.int32)
        if B_pad != B:
            idx = jnp.pad(idx, (0, B_pad - B), constant_values=sentinel)
        return idx.reshape(1, B_pad)

    # Out-of-range sentinels in the pad region -> all-zero one-hots -> score 0.
    src_t = pad_idx(src_idx, num_nodes)
    dst_t = pad_idx(dst_idx, num_nodes)
    rel_t = pad_idx(rel_idx, num_rel)

    entT = entity_embedding.astype(table_dtype).T                           # (H, N)
    projS = jnp.transpose(projection_matrix, (0, 2, 1)) \
               .reshape(num_rel * Rd, H).astype(table_dtype)                # (nr*Rd, H)
    relT = relation_embedding.astype(table_dtype).T                         # (Rd, nr)

    kernel = functools.partial(transr_kernel, nr=num_rel, rd=Rd,
                               lane_chunk=lane_chunk)

    out = pl.pallas_call(
        kernel,
        out_shape=jax.ShapeDtypeStruct((1, B_pad), f32),
        grid_spec=pltpu.PrefetchScalarGridSpec(
            num_scalar_prefetch=0,
            grid=(n_tiles,),
            in_specs=[
                pl.BlockSpec((1, tb), lambda i: (0, i)),                    # src idx
                pl.BlockSpec((1, tb), lambda i: (0, i)),                    # dst idx
                pl.BlockSpec((1, tb), lambda i: (0, i)),                    # rel idx
                pl.BlockSpec((H, num_nodes), lambda i: (0, 0)),             # entity table (resident)
                pl.BlockSpec((num_rel * Rd, H), lambda i: (0, 0)),          # stacked proj (resident)
                pl.BlockSpec((Rd, num_rel), lambda i: (0, 0)),              # rel table (resident)
            ],
            out_specs=pl.BlockSpec((1, tb), lambda i: (0, i)),              # lane-dense scores
        ),
        compiler_params=pltpu.CompilerParams(
            dimension_semantics=("parallel",),
            vmem_limit_bytes=32 * 1024 * 1024,
        ),
    )(src_t, dst_t, rel_t, entT, projS, relT)
    return out[0, :B]                                                        # (B,)


def transr_reference(src_idx, rel_idx, dst_idx,
                     entity_embedding, relation_embedding, projection_matrix):
    """Pure-JAX reference mirroring the PyTorch forward."""
    src_emb = entity_embedding[src_idx]
    dst_emb = entity_embedding[dst_idx]
    rel_emb = relation_embedding[rel_idx]
    proj = projection_matrix[rel_idx]
    src_proj = jnp.einsum("bh,bhr->br", src_emb, proj)
    dst_proj = jnp.einsum("bh,bhr->br", dst_emb, proj)

    def l2n(x):
        n = jnp.sqrt(jnp.sum(x * x, axis=-1, keepdims=True))
        return x / jnp.maximum(n, 1e-12)

    diff = l2n(src_proj) + rel_emb - l2n(dst_proj)
    return jnp.sqrt(jnp.sum(diff * diff, axis=-1))


if __name__ == "__main__":
    # Module config (small, consistent with TransR.__init__)
    num_nodes = 64
    num_relations = 7
    hidden_channels = 32   # entity embedding dim H
    r_dim = 16             # relation-space dim Rd

    key = jax.random.PRNGKey(0)
    k_ent, k_rel, k_proj, k_idx = jax.random.split(key, 4)

    entity_embedding = jax.random.normal(
        k_ent, (num_nodes, hidden_channels), dtype=jnp.float32)
    relation_embedding = jax.random.normal(
        k_rel, (num_relations, r_dim), dtype=jnp.float32)
    projection_matrix = jax.random.normal(
        k_proj, (num_relations, hidden_channels, r_dim), dtype=jnp.float32)

    # batch=256 -> tb=128, 2 tiles (single-chunk path, 2 TCs on v7x);
    # batch=1280 -> tb=512, 3 tiles (exercises the chunked fori_loop epilogue).
    for batch in (256, 1280):
        ks, kr, kd = jax.random.split(jax.random.fold_in(k_idx, batch), 3)
        src = jax.random.randint(ks, (batch,), 0, num_nodes, dtype=jnp.int32)
        rel = jax.random.randint(kr, (batch,), 0, num_relations, dtype=jnp.int32)
        dst = jax.random.randint(kd, (batch,), 0, num_nodes, dtype=jnp.int32)

        score = jax.block_until_ready(
            transr_forward(src, rel, dst,
                           entity_embedding, relation_embedding,
                           projection_matrix, batch_tile=512))
        ref = jax.block_until_ready(
            transr_reference(src, rel, dst,
                             entity_embedding, relation_embedding,
                             projection_matrix))

        assert score.shape == (batch,)
        assert jnp.allclose(score, ref, rtol=1e-3, atol=1e-3), \
            float(jnp.max(jnp.abs(score - ref)))
    print("KERNEL_OK")
</pallas_src>

<mosaic_0001>
module attributes {stable_mosaic.version = 11 : i64} {
  func.func @transr_kernel(%arg0: i32, %arg1: memref<1x128xi32, #tpu.memory_space<vmem>>, %arg2: memref<1x128xi32, #tpu.memory_space<vmem>>, %arg3: memref<1x128xi32, #tpu.memory_space<vmem>>, %arg4: memref<32x64xf32, #tpu.memory_space<vmem>>, %arg5: memref<112x32xf32, #tpu.memory_space<vmem>>, %arg6: memref<16x7xf32, #tpu.memory_space<vmem>>, %arg7: memref<1x128xf32, #tpu.memory_space<vmem>>) attributes {dimension_semantics = [#tpu.dimension_semantics<parallel>], iteration_bounds = array<i64: 2>, scalar_prefetch = 0 : i64, scratch_operands = 0 : i64, tpu.core_type = #tpu.core_type<tc>, window_params = [{transform_indices = @transform_0, window_bounds = array<i64: 1, 128>}, {transform_indices = @transform_1, window_bounds = array<i64: 1, 128>}, {transform_indices = @transform_2, window_bounds = array<i64: 1, 128>}, {pipeline_mode = #tpu.pipeline_mode<synchronous>, transform_indices = @transform_3, window_bounds = array<i64: 32, 64>}, {pipeline_mode = #tpu.pipeline_mode<synchronous>, transform_indices = @transform_4, window_bounds = array<i64: 112, 32>}, {pipeline_mode = #tpu.pipeline_mode<synchronous>, transform_indices = @transform_5, window_bounds = array<i64: 16, 7>}, {transform_indices = @transform_6, window_bounds = array<i64: 1, 128>}]} {
    %c0 = arith.constant 0 : index
    %c0_0 = arith.constant 0 : index
    %0 = vector.load %arg4[%c0, %c0_0] : memref<32x64xf32, #tpu.memory_space<vmem>>, vector<32x64xf32>
    %c0_1 = arith.constant 0 : index
    %c0_2 = arith.constant 0 : index
    %1 = vector.load %arg5[%c0_1, %c0_2] : memref<112x32xf32, #tpu.memory_space<vmem>>, vector<112x32xf32>
    %c0_3 = arith.constant 0 : index
    %c0_4 = arith.constant 0 : index
    %2 = vector.load %arg6[%c0_3, %c0_4] : memref<16x7xf32, #tpu.memory_space<vmem>>, vector<16x7xf32>
    %c0_5 = arith.constant 0 : index
    %c0_6 = arith.constant 0 : index
    %3 = vector.load %arg1[%c0_5, %c0_6] : memref<1x128xi32, #tpu.memory_space<vmem>>, vector<1x128xi32>
    %c0_7 = arith.constant 0 : index
    %c0_8 = arith.constant 0 : index
    %4 = vector.load %arg2[%c0_7, %c0_8] : memref<1x128xi32, #tpu.memory_space<vmem>>, vector<1x128xi32>
    %c0_9 = arith.constant 0 : index
    %c0_10 = arith.constant 0 : index
    %5 = vector.load %arg3[%c0_9, %c0_10] : memref<1x128xi32, #tpu.memory_space<vmem>>, vector<1x128xi32>
    %6 = tpu.iota {dimensions = array<i32: 0>} : vector<64x128xi32>
    %7 = vector.broadcast %3 : vector<1x128xi32> to vector<64x128xi32>
    %8 = arith.cmpi eq, %6, %7 : vector<64x128xi32>
    %9 = arith.extui %8 : vector<64x128xi1> to vector<64x128xi32>
    %10 = arith.sitofp %9 : vector<64x128xi32> to vector<64x128xf32>
    %11 = vector.broadcast %4 : vector<1x128xi32> to vector<64x128xi32>
    %12 = arith.cmpi eq, %6, %11 : vector<64x128xi32>
    %13 = arith.extui %12 : vector<64x128xi1> to vector<64x128xi32>
    %14 = arith.sitofp %13 : vector<64x128xi32> to vector<64x128xf32>
    %cst = arith.constant dense<0.000000e+00> : vector<32x128xf32>
    %15 = tpu.matmul %0, %10, %cst {dimension_numbers = #tpu.dot_dimension_numbers<[1], [0], [0], [1], [0, 0, 1, 1], [], []>} : vector<32x64xf32>, vector<64x128xf32>, vector<32x128xf32> -> vector<32x128xf32>
    %cst_11 = arith.constant dense<0.000000e+00> : vector<32x128xf32>
    %16 = tpu.matmul %0, %14, %cst_11 {dimension_numbers = #tpu.dot_dimension_numbers<[1], [0], [0], [1], [0, 0, 1, 1], [], []>} : vector<32x64xf32>, vector<64x128xf32>, vector<32x128xf32> -> vector<32x128xf32>
    %cst_12 = arith.constant dense<0.000000e+00> : vector<112x128xf32>
    %17 = tpu.matmul %1, %15, %cst_12 {dimension_numbers = #tpu.dot_dimension_numbers<[1], [0], [0], [1], [0, 0, 1, 1], [], []>} : vector<112x32xf32>, vector<32x128xf32>, vector<112x128xf32> -> vector<112x128xf32>
    %18 = vector.shape_cast %17 : vector<112x128xf32> to vector<7x16x128xf32>
    %cst_13 = arith.constant dense<0.000000e+00> : vector<112x128xf32>
    %19 = tpu.matmul %1, %16, %cst_13 {dimension_numbers = #tpu.dot_dimension_numbers<[1], [0], [0], [1], [0, 0, 1, 1], [], []>} : vector<112x32xf32>, vector<32x128xf32>, vector<112x128xf32> -> vector<112x128xf32>
    %20 = vector.shape_cast %19 : vector<112x128xf32> to vector<7x16x128xf32>
    %21 = tpu.iota {dimensions = array<i32: 0>} : vector<7x128xi32>
    %22 = vector.broadcast %5 : vector<1x128xi32> to vector<7x128xi32>
    %23 = arith.cmpi eq, %21, %22 : vector<7x128xi32>
    %24 = arith.extui %23 : vector<7x128xi1> to vector<7x128xi32>
    %25 = arith.sitofp %24 : vector<7x128xi32> to vector<7x128xf32>
    %cst_14 = arith.constant dense<0.000000e+00> : vector<16x128xf32>
    %26 = tpu.matmul %2, %25, %cst_14 {dimension_numbers = #tpu.dot_dimension_numbers<[1], [0], [0], [1], [0, 0, 1, 1], [], []>} : vector<16x7xf32>, vector<7x128xf32>, vector<16x128xf32> -> vector<16x128xf32>
    %27 = vector.shape_cast %25 : vector<7x128xf32> to vector<7x1x128xf32>
    %28 = vector.broadcast %27 : vector<7x1x128xf32> to vector<7x16x128xf32>
    %29 = arith.mulf %18, %28 : vector<7x16x128xf32>
    %cst_15 = arith.constant dense<0.000000e+00> : vector<16x128xf32>
    %30 = vector.multi_reduction <add>, %29, %cst_15 [0] : vector<7x16x128xf32> to vector<16x128xf32>
    %31 = vector.broadcast %27 : vector<7x1x128xf32> to vector<7x16x128xf32>
    %32 = arith.mulf %20, %31 : vector<7x16x128xf32>
    %cst_16 = arith.constant dense<0.000000e+00> : vector<16x128xf32>
    %33 = vector.multi_reduction <add>, %32, %cst_16 [0] : vector<7x16x128xf32> to vector<16x128xf32>
    %34 = arith.mulf %30, %30 : vector<16x128xf32>
    %cst_17 = arith.constant dense<0.000000e+00> : vector<128xf32>
    %35 = vector.multi_reduction <add>, %34, %cst_17 [0] : vector<16x128xf32> to vector<128xf32>
    %36 = vector.shape_cast %35 : vector<128xf32> to vector<1x128xf32>
    %cst_18 = arith.constant 1.000000e-24 : f32
    %37 = vector.broadcast %cst_18 : f32 to vector<1x128xf32>
    %38 = arith.maximumf %36, %37 : vector<1x128xf32>
    %39 = math.rsqrt %38 : vector<1x128xf32>
    %40 = vector.broadcast %39 : vector<1x128xf32> to vector<16x128xf32>
    %41 = arith.mulf %30, %40 : vector<16x128xf32>
    %42 = arith.addf %41, %26 : vector<16x128xf32>
    %43 = arith.mulf %33, %33 : vector<16x128xf32>
    %cst_19 = arith.constant dense<0.000000e+00> : vector<128xf32>
    %44 = vector.multi_reduction <add>, %43, %cst_19 [0] : vector<16x128xf32> to vector<128xf32>
    %45 = vector.shape_cast %44 : vector<128xf32> to vector<1x128xf32>
    %cst_20 = arith.constant 1.000000e-24 : f32
    %46 = vector.broadcast %cst_20 : f32 to vector<1x128xf32>
    %47 = arith.maximumf %45, %46 : vector<1x128xf32>
    %48 = math.rsqrt %47 : vector<1x128xf32>
    %49 = vector.broadcast %48 : vector<1x128xf32> to vector<16x128xf32>
    %50 = arith.mulf %33, %49 : vector<16x128xf32>
    %51 = arith.subf %42, %50 : vector<16x128xf32>
    %52 = arith.mulf %51, %51 : vector<16x128xf32>
    %cst_21 = arith.constant dense<0.000000e+00> : vector<128xf32>
    %53 = vector.multi_reduction <add>, %52, %cst_21 [0] : vector<16x128xf32> to vector<128xf32>
    %54 = vector.shape_cast %53 : vector<128xf32> to vector<1x128xf32>
    %55 = math.sqrt %54 : vector<1x128xf32>
    %c0_22 = arith.constant 0 : index
    %c0_23 = arith.constant 0 : index
    %56 = vector.load %arg7[%c0_22, %c0_23] : memref<1x128xf32, #tpu.memory_space<vmem>>, vector<1x128xf32>
    tpu.vector_store %arg7[%c0_22, %c0_23], %55 {strides = array<i32>} : memref<1x128xf32, #tpu.memory_space<vmem>>, vector<1x128xf32>,
    return
  }
  func.func @transform_0(%arg0: i32) -> (i32, i32) {
    %c0_i32 = arith.constant 0 : i32
    %c0_i32_0 = arith.constant 0 : i32
    return %c0_i32, %arg0 : i32, i32
  }
  func.func @transform_1(%arg0: i32) -> (i32, i32) {
    %c0_i32 = arith.constant 0 : i32
    %c0_i32_0 = arith.constant 0 : i32
    return %c0_i32, %arg0 : i32, i32
  }
  func.func @transform_2(%arg0: i32) -> (i32, i32) {
    %c0_i32 = arith.constant 0 : i32
    %c0_i32_0 = arith.constant 0 : i32
    return %c0_i32, %arg0 : i32, i32
  }
  func.func @transform_3(%arg0: i32) -> (i32, i32) {
    %c0_i32 = arith.constant 0 : i32
    %c0_i32_0 = arith.constant 0 : i32
    %c0_i32_1 = arith.constant 0 : i32
    return %c0_i32, %c0_i32_0 : i32, i32
  }
  func.func @transform_4(%arg0: i32) -> (i32, i32) {
    %c0_i32 = arith.constant 0 : i32
    %c0_i32_0 = arith.constant 0 : i32
    %c0_i32_1 = arith.constant 0 : i32
    return %c0_i32, %c0_i32_0 : i32, i32
  }
  func.func @transform_5(%arg0: i32) -> (i32, i32) {
    %c0_i32 = arith.constant 0 : i32
    %c0_i32_0 = arith.constant 0 : i32
    %c0_i32_1 = arith.constant 0 : i32
    return %c0_i32, %c0_i32_0 : i32, i32
  }
  func.func @transform_6(%arg0: i32) -> (i32, i32) {
    %c0_i32 = arith.constant 0 : i32
    %c0_i32_0 = arith.constant 0 : i32
    return %c0_i32, %arg0 : i32, i32
  }
}

</mosaic_0001>

<llo_original>
// kernel: tpu_custom_call.1
$region0: #{tpu_custom_call.1}
  #allocation0 [shape = 'u32[]', space=smem, size = 0x4, offset = 0x4, fixed_abs, tag = 'smem constant byte address 0x4 - core index']
  #allocation1 [shape = 'u32[144,128]{1,0:T(1,128)}', space=vmem, size = 0x12000, scoped, tag = 'internal scratch']
  %s0 = inlined_call_operand.vmem [shape: s32[1,256], index: 0, kind: input, shape index: {}]
  %s1 = inlined_call_operand.vmem [shape: s32[1,256], index: 1, kind: input, shape index: {}]
  %s2 = inlined_call_operand.vmem [shape: s32[1,256], index: 2, kind: input, shape index: {}]
  %s3 = inlined_call_operand.vmem [shape: f32[32,64], index: 3, kind: input, shape index: {}]
  %s4 = inlined_call_operand.vmem [shape: f32[112,32], index: 4, kind: input, shape index: {}]
  %s5 = inlined_call_operand.vmem [shape: f32[16,7], index: 5, kind: input, shape index: {}]
  %s6 = inlined_call_operand.hbm [shape: f32[1,256], index: 6, kind: output, shape index: {}]
  %s7 = sld [smem:[#allocation0]]
  $region57: #{tpu_custom_call.1} parent=0
    _
  %s9 = ssub.s32 1, %s7
  %s10 = scalar_select 0, %s9, %s7
  $region1: #{tpu_custom_call.1} parent=0
    #allocation2 [shape = 'u8[1024]{0}', space=vmem, size = 0x400, scoped, tag = 'output window, operand 0']
    #allocation3 [shape = 's32[2]{0}', space=sflag, size = 0x8, scoped, tag = 'scoped memory for tpu_custom_call.1']
    %11 = vsyncpa [#allocation3], 0
    %s12 = scalar_lea.sflag [#allocation3], 1
    %13 = vsyncpa %s12, 0
    loop: start=0, step=1, limit=4
    $region2: #{tpu_custom_call.1} parent=1 // loop_pre_header
      _
    $region3: #{tpu_custom_call.1} parent=1 // loop_header
      %s15 = sphi 0, %s19
      %p16 = scmp.ge.s32.totalorder %s15, 4
      %s25 = sphi 0, %s27
      %s28 = sphi 0, %s25
      %s29 = sphi 0, %s28
      %s45 = sphi 0, %s29
      %s51 = sphi 0, %s53
      %s54 = sphi 0, %s51
      %s55 = sphi 0, %s54
      %s71 = sphi 0, %s55
      %s77 = sphi 0, %s79
      %s80 = sphi 0, %s77
      %s81 = sphi 0, %s80
      %s97 = sphi 0, %s81
      %s101 = sphi 0, %s101
      %s103 = sphi 0, %s101
      %s104 = sphi 0, %s103
      %s118 = sphi 0, %s104
      %s122 = sphi 0, %s122
      %s124 = sphi 0, %s122
      %s125 = sphi 0, %s124
      %s139 = sphi 0, %s125
      %s143 = sphi 0, %s143
      %s145 = sphi 0, %s143
      %s146 = sphi 0, %s145
      %s160 = sphi 0, %s146
      %s166 = sphi 0, %s168
      %s169 = sphi 0, %s166
      %s170 = sphi 0, %s169
      %s186 = sphi 0, %s170
    $region4: #{tpu_custom_call.1} parent=1 // loop_header_branch
      %18 = sbr.rel (%p16) target = $region8
    $region5: #{tpu_custom_call.1} parent=1 // loop_body
      %s20 = ssub.s32 %s15, 1
      %s21 = ssub.s32 %s15, 2
      %s22 = sadd.s32 %s15, 1
      %s23 = ssub.s32 %s15, %s22
      %p24 = scmp.eq.s32.totalorder %s23, 0
      %s26 = sadd.s32 %s25, 1
      %s27 = scalar_select %p24, %s25, %s26
      %p30 = pneg %p24
      %p31 = scmp.eq.s32.totalorder %s15, 1
      %p32 = por %p30, %p31
      %p33 = scmp.ne.s32.totalorder %s25, %s28
      %p34 = scmp.eq.s32.totalorder %s15, 0
      %p35 = por %p33, %p34
      %p36 = scmp.ne.s32.totalorder %s25, %s28
      %p37 = scmp.eq.s32.totalorder %s20, 1
      %p38 = por %p36, %p37
      %p39 = scmp.ne.s32.totalorder %s28, %s29
      %p40 = scmp.eq.s32.totalorder %s20, 0
      %p41 = por %p39, %p40
      %p42 = scmp.ne.s32.totalorder %s28, %s29
      %p43 = scmp.eq.s32.totalorder %s21, 1
      %p44 = por %p42, %p43
      %p46 = scmp.ne.s32.totalorder %s29, %s45
      %p47 = scmp.eq.s32.totalorder %s21, 0
      %p48 = por %p46, %p47
      %s49 = ssub.s32 %s15, %s22
      %p50 = scmp.eq.s32.totalorder %s49, 0
      %s52 = sadd.s32 %s51, 1
      %s53 = scalar_select %p50, %s51, %s52
      %p56 = pneg %p50
      %p57 = scmp.eq.s32.totalorder %s15, 1
      %p58 = por %p56, %p57
      %p59 = scmp.ne.s32.totalorder %s51, %s54
      %p60 = scmp.eq.s32.totalorder %s15, 0
      %p61 = por %p59, %p60
      %p62 = scmp.ne.s32.totalorder %s51, %s54
      %p63 = scmp.eq.s32.totalorder %s20, 1
      %p64 = por %p62, %p63
      %p65 = scmp.ne.s32.totalorder %s54, %s55
      %p66 = scmp.eq.s32.totalorder %s20, 0
      %p67 = por %p65, %p66
      %p68 = scmp.ne.s32.totalorder %s54, %s55
      %p69 = scmp.eq.s32.totalorder %s21, 1
      %p70 = por %p68, %p69
      %p72 = scmp.ne.s32.totalorder %s55, %s71
      %p73 = scmp.eq.s32.totalorder %s21, 0
      %p74 = por %p72, %p73
      %s75 = ssub.s32 %s15, %s22
      %p76 = scmp.eq.s32.totalorder %s75, 0
      %s78 = sadd.s32 %s77, 1
      %s79 = scalar_select %p76, %s77, %s78
      %p82 = pneg %p76
      %p83 = scmp.eq.s32.totalorder %s15, 1
      %p84 = por %p82, %p83
      %p85 = scmp.ne.s32.totalorder %s77, %s80
      %p86 = scmp.eq.s32.totalorder %s15, 0
      %p87 = por %p85, %p86
      %p88 = scmp.ne.s32.totalorder %s77, %s80
      %p89 = scmp.eq.s32.totalorder %s20, 1
      %p90 = por %p88, %p89
      %p91 = scmp.ne.s32.totalorder %s80, %s81
      %p92 = scmp.eq.s32.totalorder %s20, 0
      %p93 = por %p91, %p92
      %p94 = scmp.ne.s32.totalorder %s80, %s81
      %p95 = scmp.eq.s32.totalorder %s21, 1
      %p96 = por %p94, %p95
      %p98 = scmp.ne.s32.totalorder %s81, %s97
      %p99 = scmp.eq.s32.totalorder %s21, 0
      %p100 = por %p98, %p99
      %s102 = sadd.s32 %s101, 1
      %p105 = scmp.eq.s32.totalorder %s15, 1
      %p106 = scmp.ne.s32.totalorder %s101, %s103
      %p107 = scmp.eq.s32.totalorder %s15, 0
      %p108 = por %p106, %p107
      %p109 = scmp.ne.s32.totalorder %s101, %s103
      %p110 = scmp.eq.s32.totalorder %s20, 1
      %p111 = por %p109, %p110
      %p112 = scmp.ne.s32.totalorder %s103, %s104
      %p113 = scmp.eq.s32.totalorder %s20, 0
      %p114 = por %p112, %p113
      %p115 = scmp.ne.s32.totalorder %s103, %s104
      %p116 = scmp.eq.s32.totalorder %s21, 1
      %p117 = por %p115, %p116
      %p119 = scmp.ne.s32.totalorder %s104, %s118
      %p120 = scmp.eq.s32.totalorder %s21, 0
      %p121 = por %p119, %p120
      %s123 = sadd.s32 %s122, 1
      %p126 = scmp.eq.s32.totalorder %s15, 1
      %p127 = scmp.ne.s32.totalorder %s122, %s124
      %p128 = scmp.eq.s32.totalorder %s15, 0
      %p129 = por %p127, %p128
      %p130 = scmp.ne.s32.totalorder %s122, %s124
      %p131 = scmp.eq.s32.totalorder %s20, 1
      %p132 = por %p130, %p131
      %p133 = scmp.ne.s32.totalorder %s124, %s125
      %p134 = scmp.eq.s32.totalorder %s20, 0
      %p135 = por %p133, %p134
      %p136 = scmp.ne.s32.totalorder %s124, %s125
      %p137 = scmp.eq.s32.totalorder %s21, 1
      %p138 = por %p136, %p137
      %p140 = scmp.ne.s32.totalorder %s125, %s139
      %p141 = scmp.eq.s32.totalorder %s21, 0
      %p142 = por %p140, %p141
      %s144 = sadd.s32 %s143, 1
      %p147 = scmp.eq.s32.totalorder %s15, 1
      %p148 = scmp.ne.s32.totalorder %s143, %s145
      %p149 = scmp.eq.s32.totalorder %s15, 0
      %p150 = por %p148, %p149
      %p151 = scmp.ne.s32.totalorder %s143, %s145
      %p152 = scmp.eq.s32.totalorder %s20, 1
      %p153 = por %p151, %p152
      %p154 = scmp.ne.s32.totalorder %s145, %s146
      %p155 = scmp.eq.s32.totalorder %s20, 0
      %p156 = por %p154, %p155
      %p157 = scmp.ne.s32.totalorder %s145, %s146
      %p158 = scmp.eq.s32.totalorder %s21, 1
      %p159 = por %p157, %p158
      %p161 = scmp.ne.s32.totalorder %s146, %s160
      %p162 = scmp.eq.s32.totalorder %s21, 0
      %p163 = por %p161, %p162
      %s164 = ssub.s32 %s15, %s22
      %p165 = scmp.eq.s32.totalorder %s164, 0
      %s167 = sadd.s32 %s166, 1
      %s168 = scalar_select %p165, %s166, %s167
      %p171 = pneg %p165
      %p172 = scmp.eq.s32.totalorder %s15, 1
      %p173 = por %p171, %p172
      %p174 = scmp.ne.s32.totalorder %s166, %s169
      %p175 = scmp.eq.s32.totalorder %s15, 0
      %p176 = por %p174, %p175
      %p177 = scmp.ne.s32.totalorder %s166, %s169
      %p178 = scmp.eq.s32.totalorder %s20, 1
      %p179 = por %p177, %p178
      %p180 = scmp.ne.s32.totalorder %s169, %s170
      %p181 = scmp.eq.s32.totalorder %s20, 0
      %p182 = por %p180, %p181
      %p183 = scmp.ne.s32.totalorder %s169, %s170
      %p184 = scmp.eq.s32.totalorder %s21, 1
      %p185 = por %p183, %p184
      %p187 = scmp.ne.s32.totalorder %s170, %s186
      %p188 = scmp.eq.s32.totalorder %s21, 0
      %p189 = por %p187, %p188
      %p190 = scmp.le.s32.totalorder 1, %s15
      %p191 = scmp.lt.s32.totalorder %s15, 3
      %p192 = pnand %p190, %p191
      %p193 = pneg %p192
      // Predicated region
      $region9: #{tpu_custom_call.1} parent=5 // pred_check
        _
      $region10: #{tpu_custom_call.1} parent=5 // pred_check_branch
        %195 = sbr.rel (%p192) target = $region12
      $region11: #{tpu_custom_call.1} parent=5 // pred_region
        %s196 = ssub.s32 %s15, 1
        // Predicated region
        $region13: #{tpu_custom_call.1} parent=11 // pred_check
          %p197 = pneg %p114
        $region14: #{tpu_custom_call.1} parent=11 // pred_check_branch
          %199 = sbr.rel (%p197) target = $region16
        $region15: #{tpu_custom_call.1} parent=11 // pred_region
          _
        $region16: #{tpu_custom_call.1} parent=11 // pred_fallthru
          _
        // Predicated region
        $region17: #{tpu_custom_call.1} parent=11 // pred_check
          %p200 = pneg %p135
        $region18: #{tpu_custom_call.1} parent=11 // pred_check_branch
          %202 = sbr.rel (%p200) target = $region20
        $region19: #{tpu_custom_call.1} parent=11 // pred_region
          _
        $region20: #{tpu_custom_call.1} parent=11 // pred_fallthru
          _
        // Predicated region
        $region21: #{tpu_custom_call.1} parent=11 // pred_check
          %p203 = pneg %p156
        $region22: #{tpu_custom_call.1} parent=11 // pred_check_branch
          %205 = sbr.rel (%p203) target = $region24
        $region23: #{tpu_custom_call.1} parent=11 // pred_region
          _
        $region24: #{tpu_custom_call.1} parent=11 // pred_fallthru
          _
      $region12: #{tpu_custom_call.1} parent=5 // pred_fallthru
        _
      %p206 = scmp.lt.s32.totalorder %s15, 2
      // Predicated region
      $region25: #{tpu_custom_call.1} parent=5 // pred_check
        %p207 = pneg %p206
      $region26: #{tpu_custom_call.1} parent=5 // pred_check_branch
        %209 = sbr.rel (%p207) target = $region28
      $region27: #{tpu_custom_call.1} parent=5 // pred_region
        // Predicated region
        $region29: #{tpu_custom_call.1} parent=27 // pred_check
          %p210 = pneg %p35
        $region30: #{tpu_custom_call.1} parent=27 // pred_check_branch
          %212 = sbr.rel (%p210) target = $region32
        $region31: #{tpu_custom_call.1} parent=27 // pred_region
          %p213 = scmp.lt.s32.totalorder %s15, 1
          %s214 = scalar_select %p213, %s15, 1
          %s215 = scalar_lea.vmem %s0, %s214
        $region32: #{tpu_custom_call.1} parent=27 // pred_fallthru
          _
        // Predicated region
        $region33: #{tpu_custom_call.1} parent=27 // pred_check
          %p216 = pneg %p61
        $region34: #{tpu_custom_call.1} parent=27 // pred_check_branch
          %218 = sbr.rel (%p216) target = $region36
        $region35: #{tpu_custom_call.1} parent=27 // pred_region
          %p219 = scmp.lt.s32.totalorder %s15, 1
          %s220 = scalar_select %p219, %s15, 1
          %s221 = scalar_lea.vmem %s1, %s220
        $region36: #{tpu_custom_call.1} parent=27 // pred_fallthru
          _
        // Predicated region
        $region37: #{tpu_custom_call.1} parent=27 // pred_check
          %p222 = pneg %p87
        $region38: #{tpu_custom_call.1} parent=27 // pred_check_branch
          %224 = sbr.rel (%p222) target = $region40
        $region39: #{tpu_custom_call.1} parent=27 // pred_region
          %p225 = scmp.lt.s32.totalorder %s15, 1
          %s226 = scalar_select %p225, %s15, 1
          %s227 = scalar_lea.vmem %s2, %s226
        $region40: #{tpu_custom_call.1} parent=27 // pred_fallthru
          _
      $region28: #{tpu_custom_call.1} parent=5 // pred_fallthru
        _
      %p228 = scmp.le.s32.totalorder 1, %s15
      %p229 = scmp.lt.s32.totalorder %s15, 3
      %p230 = pnand %p228, %p229
      %p231 = pneg %p230
      // Predicated region
      $region41: #{tpu_custom_call.1} parent=5 // pred_check
        _
      $region42: #{tpu_custom_call.1} parent=5 // pred_check_branch
        %233 = sbr.rel (%p230) target = $region44
      $region43: #{tpu_custom_call.1} parent=5 // pred_region
        %s234 = ssub.s32 %s15, 1
        %p235 = scmp.lt.s32.totalorder %s20, 1
        %s236 = scalar_select %p235, %s20, 1
        %s237 = scalar_lea.vmem %s0, %s236
        %p238 = pneg %p41
        %p239 = pneg %p38
        %p240 = scmp.lt.s32.totalorder %s20, 1
        %s241 = scalar_select %p240, %s20, 1
        %s242 = scalar_lea.vmem %s1, %s241
        %p243 = pneg %p67
        %p244 = pneg %p64
        %p245 = scmp.lt.s32.totalorder %s20, 1
        %s246 = scalar_select %p245, %s20, 1
        %s247 = scalar_lea.vmem %s2, %s246
        %p248 = pneg %p93
        %p249 = pneg %p90
        %p250 = pneg %p114
        %p251 = pneg %p111
        %p252 = pneg %p135
        %p253 = pneg %p132
        %p254 = pneg %p156
        %p255 = pneg %p153
        %p256 = pneg %p182
        %p257 = pneg %p179
        %s258 = sand.u32 %s169, 1
        %s259 = scalar_lea.sflag [#allocation3], %s258
        %s260 = sand.u32 %s169, 1
        %s261 = scalar_lea.vmem [#allocation2], %s260
        %p262 = scmp.lt.s32.totalorder %s20, 1
        %s263 = scalar_select %p262, %s20, 1
        %s264 = scalar_lea.vmem %s0, %s263
        %p265 = scmp.lt.s32.totalorder %s20, 1
        %s266 = scalar_select %p265, %s20, 1
        %s267 = scalar_lea.vmem %s1, %s266
        %p268 = scmp.lt.s32.totalorder %s20, 1
        %s269 = scalar_select %p268, %s20, 1
        %s270 = scalar_lea.vmem %s2, %s269
        %v271 = vld [vmem:[%s3] sm:$0xff]
        %v272 = vld [vmem:[%s3 + $0x8] sm:$0xff]
        %v273 = vld [vmem:[%s3 + $0x10] sm:$0xff]
        %v274 = vld [vmem:[%s3 + $0x18] sm:$0xff]
        %v275 = vld [vmem:[%s4] sm:$0xff]
        %v276 = vld [vmem:[%s4 + $0x8] sm:$0xff]
        %v277 = vld [vmem:[%s4 + $0x10] sm:$0xff]
        %v278 = vld [vmem:[%s4 + $0x18] sm:$0xff]
        %v279 = vld [vmem:[%s4 + $0x20] sm:$0xff]
        %v280 = vld [vmem:[%s4 + $0x28] sm:$0xff]
        %v281 = vld [vmem:[%s4 + $0x30] sm:$0xff]
        %v282 = vld [vmem:[%s4 + $0x38] sm:$0xff]
        %v283 = vld [vmem:[%s4 + $0x40] sm:$0xff]
        %v284 = vld [vmem:[%s4 + $0x48] sm:$0xff]
        %v285 = vld [vmem:[%s4 + $0x50] sm:$0xff]
        %v286 = vld [vmem:[%s4 + $0x58] sm:$0xff]
        %v287 = vld [vmem:[%s4 + $0x60] sm:$0xff]
        %v288 = vld [vmem:[%s4 + $0x68] sm:$0xff]
        %v289 = vld [vmem:[%s5] sm:$0xff]
        %v290 = vld [vmem:[%s5 + $0x8] sm:$0xff]
        %v291 = vld [vmem:[%s264] sm:$0x1]
        %v292 = vld [vmem:[%s267] sm:$0x1]
        %v293 = vld [vmem:[%s270] sm:$0x1]
        %v294 = vlaneseq
        %v295 = vshrl.u32 %v294, 7
        %v296 = vadd.s32 %v295, 8
        %v297 = vadd.s32 %v295, 16
        %v298 = vadd.s32 %v295, 24
        %v299 = vadd.s32 %v295, 32
        %v300 = vadd.s32 %v295, 40
        %v301 = vadd.s32 %v295, 48
        %v302 = vadd.s32 %v295, 56
        %v303 = vlaneseq
        %v304 = vshrl.u32 %v303, 7
        %v305 = vsub.s32 0, %v304
        %v306 = vrot.slane %v291, %v305
        %vm307 = vcmp.eq.s32.totalorder %v295, %v306
        %vm308 = vcmp.eq.s32.totalorder %v296, %v306
        %vm309 = vcmp.eq.s32.totalorder %v297, %v306
        %vm310 = vcmp.eq.s32.totalorder %v298, %v306
        %vm311 = vcmp.eq.s32.totalorder %v299, %v306
        %vm312 = vcmp.eq.s32.totalorder %v300, %v306
        %vm313 = vcmp.eq.s32.totalorder %v301, %v306
        %vm314 = vcmp.eq.s32.totalorder %v302, %v306
        %v315 = vsel %vm307, 1, 0
        %v316 = vsel %vm308, 1, 0
        %v317 = vsel %vm309, 1, 0
        %v318 = vsel %vm310, 1, 0
        %v319 = vsel %vm311, 1, 0
        %v320 = vsel %vm312, 1, 0
        %v321 = vsel %vm313, 1, 0
        %v322 = vsel %vm314, 1, 0
        %v323 = vcvt.s32.f32 %v315
        %v324 = vcvt.s32.f32 %v316
        %v325 = vcvt.s32.f32 %v317
        %v326 = vcvt.s32.f32 %v318
        %v327 = vcvt.s32.f32 %v319
        %v328 = vcvt.s32.f32 %v320
        %v329 = vcvt.s32.f32 %v321
        %v330 = vcvt.s32.f32 %v322
        %v331 = vlaneseq
        %v332 = vshrl.u32 %v331, 7
        %v333 = vsub.s32 0, %v332
        %v334 = vrot.slane %v292, %v333
        %vm335 = vcmp.eq.s32.totalorder %v295, %v334
        %vm336 = vcmp.eq.s32.totalorder %v296, %v334
        %vm337 = vcmp.eq.s32.totalorder %v297, %v334
        %vm338 = vcmp.eq.s32.totalorder %v298, %v334
        %vm339 = vcmp.eq.s32.totalorder %v299, %v334
        %vm340 = vcmp.eq.s32.totalorder %v300, %v334
        %vm341 = vcmp.eq.s32.totalorder %v301, %v334
        %vm342 = vcmp.eq.s32.totalorder %v302, %v334
        %v343 = vsel %vm335, 1, 0
        %v344 = vsel %vm336, 1, 0
        %v345 = vsel %vm337, 1, 0
        %v346 = vsel %vm338, 1, 0
        %v347 = vsel %vm339, 1, 0
        %v348 = vsel %vm340, 1, 0
        %v349 = vsel %vm341, 1, 0
        %v350 = vsel %vm342, 1, 0
        %v351 = vcvt.s32.f32 %v343
        %v352 = vcvt.s32.f32 %v344
        %v353 = vcvt.s32.f32 %v345
        %v354 = vcvt.s32.f32 %v346
        %v355 = vcvt.s32.f32 %v347
        %v356 = vcvt.s32.f32 %v348
        %v357 = vcvt.s32.f32 %v349
        %v358 = vcvt.s32.f32 %v350
        %vm359 = vcmask 523264
        %v361 = vsel %vm359, %v271, 0
        %v364 = vsel %vm359, %v272, 0
        %v367 = vsel %vm359, %v273, 0
        %v370 = vsel %vm359, %v274, 0
        %372 = vmatprep.subr.mxu0 0.0
        %373 = vmatpush1.msra.mxu0 0.0
        %374 = vmatprep.subr.mxu0 0.0
        %375 = vmatpush1.msra.mxu0 0.0
        %376 = vmatprep.subr.mxu0 0.0
        %377 = vmatpush1.msra.mxu0 0.0
        %378 = vmatprep.subr.mxu0 0.0
        %379 = vmatpush1.msra.mxu0 0.0
        %380 = vmatprep.subr.mxu0 0.0
        %381 = vmatpush1.msra.mxu0 0.0
        %382 = vmatprep.subr.mxu0 0.0
        %383 = vmatpush1.msra.mxu0 0.0
        %384 = vmatprep.subr.mxu0 0.0
        %385 = vmatpush1.msra.mxu0 0.0
        %386 = vmatprep.subr.mxu0 0.0
        %387 = vmatpush1.msra.mxu0 0.0
        %388 = vmatprep.subr.mxu0 0.0
        %389 = vmatpush1.msra.mxu0 %v330
        %390 = vmatprep.subr.mxu0 0.0
        %391 = vmatpush1.msra.mxu0 %v329
        %392 = vmatprep.subr.mxu0 0.0
        %393 = vmatpush1.msra.mxu0 %v328
        %394 = vmatprep.subr.mxu0 0.0
        %395 = vmatpush1.msra.mxu0 %v327
        %396 = vmatprep.subr.mxu0 0.0
        %397 = vmatpush1.msra.mxu0 %v326
        %398 = vmatprep.subr.mxu0 0.0
        %399 = vmatpush1.msra.mxu0 %v325
        %400 = vmatprep.subr.mxu0 0.0
        %401 = vmatpush1.msra.mxu0 %v324
        %402 = vmatprep.subr.mxu0 0.0
        %403 = vmatpush1.msra.mxu0 %v323
        %404 = vmatprep.subr.mxu0 0.0
        %405 = vmatpush2.msra.mxu0 0.0
        %406 = vmatprep.subr.mxu0 0.0
        %407 = vmatpush2.msra.mxu0 0.0
        %408 = vmatprep.subr.mxu0 0.0
        %409 = vmatpush2.msra.mxu0 0.0
        %410 = vmatprep.subr.mxu0 0.0
        %411 = vmatpush2.msra.mxu0 0.0
        %412 = vmatprep.subr.mxu0 0.0
        %413 = vmatpush2.msra.mxu0 0.0
        %414 = vmatprep.subr.mxu0 0.0
        %415 = vmatpush2.msra.mxu0 0.0
        %416 = vmatprep.subr.mxu0 0.0
        %417 = vmatpush2.msra.mxu0 0.0
        %418 = vmatprep.subr.mxu0 0.0
        %419 = vmatpush2.msra.mxu0 0.0
        %420 = vmatprep.subr.mxu0 0.0
        %421 = vmatpush2.msra.mxu0 0.0
        %422 = vmatprep.subr.mxu0 0.0
        %423 = vmatpush2.msra.mxu0 0.0
        %424 = vmatprep.subr.mxu0 0.0
        %425 = vmatpush2.msra.mxu0 0.0
        %426 = vmatprep.subr.mxu0 0.0
        %427 = vmatpush2.msra.mxu0 0.0
        %428 = vmatprep.subr.mxu0 0.0
        %429 = vmatpush2.msra.mxu0 0.0
        %430 = vmatprep.subr.mxu0 0.0
        %431 = vmatpush2.msra.mxu0 0.0
        %432 = vmatprep.subr.mxu0 0.0
        %433 = vmatpush2.msra.mxu0 0.0
        %434 = vmatprep.subr.mxu0 0.0
        %435 = vmatpush2.msra.mxu0 0.0
        %436 = vmatprep.mubr.f32.mxu0 0.0
        %437 = vmatmul.mubr.f32.gmra.mxu0 %v361
        %v438 = vpop.f32.mrf.mxu0
        %v439 = vadd.f32 0.0, %v438
        %v440 = vpop.f32.mrf.mxu0
        %441 = vmatprep.mubr.f32.mxu0 0.0
        %442 = vmatmul.mubr.f32.gmra.mxu0 %v364
        %v443 = vpop.f32.mrf.mxu0
        %v444 = vadd.f32 0.0, %v443
        %v445 = vpop.f32.mrf.mxu0
        %446 = vmatprep.mubr.f32.mxu0 0.0
        %447 = vmatmul.mubr.f32.gmra.mxu0 %v367
        %v448 = vpop.f32.mrf.mxu0
        %v449 = vadd.f32 0.0, %v448
        %v450 = vpop.f32.mrf.mxu0
        %451 = vmatprep.mubr.f32.mxu0 0.0
        %452 = vmatmul.mubr.f32.gmra.mxu0 %v370
        %v453 = vpop.f32.mrf.mxu0
        %v454 = vadd.f32 0.0, %v453
        %v455 = vpop.f32.mrf.mxu0
        %456 = vdwg.mxu0
        %457 = vmatprep.subr.mxu0 0.0
        %458 = vmatpush1.msra.mxu0 0.0
        %459 = vmatprep.subr.mxu0 0.0
        %460 = vmatpush1.msra.mxu0 0.0
        %461 = vmatprep.subr.mxu0 0.0
        %462 = vmatpush1.msra.mxu0 0.0
        %463 = vmatprep.subr.mxu0 0.0
        %464 = vmatpush1.msra.mxu0 0.0
        %465 = vmatprep.subr.mxu0 0.0
        %466 = vmatpush1.msra.mxu0 0.0
        %467 = vmatprep.subr.mxu0 0.0
        %468 = vmatpush1.msra.mxu0 0.0
        %469 = vmatprep.subr.mxu0 0.0
        %470 = vmatpush1.msra.mxu0 0.0
        %471 = vmatprep.subr.mxu0 0.0
        %472 = vmatpush1.msra.mxu0 0.0
        %473 = vmatprep.subr.mxu0 0.0
        %474 = vmatpush1.msra.mxu0 %v358
        %475 = vmatprep.subr.mxu0 0.0
        %476 = vmatpush1.msra.mxu0 %v357
        %477 = vmatprep.subr.mxu0 0.0
        %478 = vmatpush1.msra.mxu0 %v356
        %479 = vmatprep.subr.mxu0 0.0
        %480 = vmatpush1.msra.mxu0 %v355
        %481 = vmatprep.subr.mxu0 0.0
        %482 = vmatpush1.msra.mxu0 %v354
        %483 = vmatprep.subr.mxu0 0.0
        %484 = vmatpush1.msra.mxu0 %v353
        %485 = vmatprep.subr.mxu0 0.0
        %486 = vmatpush1.msra.mxu0 %v352
        %487 = vmatprep.subr.mxu0 0.0
        %488 = vmatpush1.msra.mxu0 %v351
        %489 = vmatprep.subr.mxu0 0.0
        %490 = vmatpush2.msra.mxu0 0.0
        %491 = vmatprep.subr.mxu0 0.0
        %492 = vmatpush2.msra.mxu0 0.0
        %493 = vmatprep.subr.mxu0 0.0
        %494 = vmatpush2.msra.mxu0 0.0
        %495 = vmatprep.subr.mxu0 0.0
        %496 = vmatpush2.msra.mxu0 0.0
        %497 = vmatprep.subr.mxu0 0.0
        %498 = vmatpush2.msra.mxu0 0.0
        %499 = vmatprep.subr.mxu0 0.0
        %500 = vmatpush2.msra.mxu0 0.0
        %501 = vmatprep.subr.mxu0 0.0
        %502 = vmatpush2.msra.mxu0 0.0
        %503 = vmatprep.subr.mxu0 0.0
        %504 = vmatpush2.msra.mxu0 0.0
        %505 = vmatprep.subr.mxu0 0.0
        %506 = vmatpush2.msra.mxu0 0.0
        %507 = vmatprep.subr.mxu0 0.0
        %508 = vmatpush2.msra.mxu0 0.0
        %509 = vmatprep.subr.mxu0 0.0
        %510 = vmatpush2.msra.mxu0 0.0
        %511 = vmatprep.subr.mxu0 0.0
        %512 = vmatpush2.msra.mxu0 0.0
        %513 = vmatprep.subr.mxu0 0.0
        %514 = vmatpush2.msra.mxu0 0.0
        %515 = vmatprep.subr.mxu0 0.0
        %516 = vmatpush2.msra.mxu0 0.0
        %517 = vmatprep.subr.mxu0 0.0
        %518 = vmatpush2.msra.mxu0 0.0
        %519 = vmatprep.subr.mxu0 0.0
        %520 = vmatpush2.msra.mxu0 0.0
        %521 = vmatprep.mubr.f32.mxu0 0.0
        %522 = vmatmul.mubr.f32.gmra.mxu0 %v361
        %v523 = vpop.f32.mrf.mxu0
        %v524 = vadd.f32 0.0, %v523
        %v525 = vpop.f32.mrf.mxu0
        %526 = vmatprep.mubr.f32.mxu0 0.0
        %527 = vmatmul.mubr.f32.gmra.mxu0 %v364
        %v528 = vpop.f32.mrf.mxu0
        %v529 = vadd.f32 0.0, %v528
        %v530 = vpop.f32.mrf.mxu0
        %531 = vmatprep.mubr.f32.mxu0 0.0
        %532 = vmatmul.mubr.f32.gmra.mxu0 %v367
        %v533 = vpop.f32.mrf.mxu0
        %v534 = vadd.f32 0.0, %v533
        %v535 = vpop.f32.mrf.mxu0
        %536 = vmatprep.mubr.f32.mxu0 0.0
        %537 = vmatmul.mubr.f32.gmra.mxu0 %v370
        %v538 = vpop.f32.mrf.mxu0
        %v539 = vadd.f32 0.0, %v538
        %v540 = vpop.f32.mrf.mxu0
        %541 = vdwg.mxu0
        %vm542 = vcmask 261120
        %v544 = vsel %vm542, %v275, 0
        %v547 = vsel %vm542, %v276, 0
        %v550 = vsel %vm542, %v277, 0
        %v553 = vsel %vm542, %v278, 0
        %v556 = vsel %vm542, %v279, 0
        %v559 = vsel %vm542, %v280, 0
        %v562 = vsel %vm542, %v281, 0
        %v565 = vsel %vm542, %v282, 0
        %v568 = vsel %vm542, %v283, 0
        %v571 = vsel %vm542, %v284, 0
        %v574 = vsel %vm542, %v285, 0
        %v577 = vsel %vm542, %v286, 0
        %v580 = vsel %vm542, %v287, 0
        %v583 = vsel %vm542, %v288, 0
        %585 = vmatprep.subr.mxu0 0.0
        %586 = vmatpush1.msra.mxu0 0.0
        %587 = vmatprep.subr.mxu0 0.0
        %588 = vmatpush1.msra.mxu0 0.0
        %589 = vmatprep.subr.mxu0 0.0
        %590 = vmatpush1.msra.mxu0 0.0
        %591 = vmatprep.subr.mxu0 0.0
        %592 = vmatpush1.msra.mxu0 0.0
        %593 = vmatprep.subr.mxu0 0.0
        %594 = vmatpush1.msra.mxu0 0.0
        %595 = vmatprep.subr.mxu0 0.0
        %596 = vmatpush1.msra.mxu0 0.0
        %597 = vmatprep.subr.mxu0 0.0
        %598 = vmatpush1.msra.mxu0 0.0
        %599 = vmatprep.subr.mxu0 0.0
        %600 = vmatpush1.msra.mxu0 0.0
        %601 = vmatprep.subr.mxu0 0.0
        %602 = vmatpush1.msra.mxu0 0.0
        %603 = vmatprep.subr.mxu0 0.0
        %604 = vmatpush1.msra.mxu0 0.0
        %605 = vmatprep.subr.mxu0 0.0
        %606 = vmatpush1.msra.mxu0 0.0
        %607 = vmatprep.subr.mxu0 0.0
        %608 = vmatpush1.msra.mxu0 0.0
        %609 = vmatprep.subr.mxu0 0.0
        %610 = vmatpush1.msra.mxu0 %v454
        %611 = vmatprep.subr.mxu0 0.0
        %612 = vmatpush1.msra.mxu0 %v449
        %613 = vmatprep.subr.mxu0 0.0
        %614 = vmatpush1.msra.mxu0 %v444
        %615 = vmatprep.subr.mxu0 0.0
        %616 = vmatpush1.msra.mxu0 %v439
        %617 = vmatprep.subr.mxu0 0.0
        %618 = vmatpush2.msra.mxu0 0.0
        %619 = vmatprep.subr.mxu0 0.0
        %620 = vmatpush2.msra.mxu0 0.0
        %621 = vmatprep.subr.mxu0 0.0
        %622 = vmatpush2.msra.mxu0 0.0
        %623 = vmatprep.subr.mxu0 0.0
        %624 = vmatpush2.msra.mxu0 0.0
        %625 = vmatprep.subr.mxu0 0.0
        %626 = vmatpush2.msra.mxu0 0.0
        %627 = vmatprep.subr.mxu0 0.0
        %628 = vmatpush2.msra.mxu0 0.0
        %629 = vmatprep.subr.mxu0 0.0
        %630 = vmatpush2.msra.mxu0 0.0
        %631 = vmatprep.subr.mxu0 0.0
        %632 = vmatpush2.msra.mxu0 0.0
        %633 = vmatprep.subr.mxu0 0.0
        %634 = vmatpush2.msra.mxu0 0.0
        %635 = vmatprep.subr.mxu0 0.0
        %636 = vmatpush2.msra.mxu0 0.0
        %637 = vmatprep.subr.mxu0 0.0
        %638 = vmatpush2.msra.mxu0 0.0
        %639 = vmatprep.subr.mxu0 0.0
        %640 = vmatpush2.msra.mxu0 0.0
        %641 = vmatprep.subr.mxu0 0.0
        %642 = vmatpush2.msra.mxu0 0.0
        %643 = vmatprep.subr.mxu0 0.0
        %644 = vmatpush2.msra.mxu0 0.0
        %645 = vmatprep.subr.mxu0 0.0
        %646 = vmatpush2.msra.mxu0 0.0
        %647 = vmatprep.subr.mxu0 0.0
        %648 = vmatpush2.msra.mxu0 0.0
        %649 = vmatprep.mubr.f32.mxu0 0.0
        %650 = vmatmul.mubr.f32.gmra.mxu0 %v544
        %v651 = vpop.f32.mrf.mxu0
        %v652 = vadd.f32 0.0, %v651
        %v653 = vpop.f32.mrf.mxu0
        %654 = vmatprep.mubr.f32.mxu0 0.0
        %655 = vmatmul.mubr.f32.gmra.mxu0 %v547
        %v656 = vpop.f32.mrf.mxu0
        %v657 = vadd.f32 0.0, %v656
        %v658 = vpop.f32.mrf.mxu0
        %659 = vmatprep.mubr.f32.mxu0 0.0
        %660 = vmatmul.mubr.f32.gmra.mxu0 %v550
        %v661 = vpop.f32.mrf.mxu0
        %v662 = vadd.f32 0.0, %v661
        %v663 = vpop.f32.mrf.mxu0
        %664 = vmatprep.mubr.f32.mxu0 0.0
        %665 = vmatmul.mubr.f32.gmra.mxu0 %v553
        %v666 = vpop.f32.mrf.mxu0
        %v667 = vadd.f32 0.0, %v666
        %v668 = vpop.f32.mrf.mxu0
        %669 = vmatprep.mubr.f32.mxu0 0.0
        %670 = vmatmul.mubr.f32.gmra.mxu0 %v556
        %v671 = vpop.f32.mrf.mxu0
        %v672 = vadd.f32 0.0, %v671
        %v673 = vpop.f32.mrf.mxu0
        %674 = vmatprep.mubr.f32.mxu0 0.0
        %675 = vmatmul.mubr.f32.gmra.mxu0 %v559
        %v676 = vpop.f32.mrf.mxu0
        %v677 = vadd.f32 0.0, %v676
        %v678 = vpop.f32.mrf.mxu0
        %679 = vmatprep.mubr.f32.mxu0 0.0
        %680 = vmatmul.mubr.f32.gmra.mxu0 %v562
        %v681 = vpop.f32.mrf.mxu0
        %v682 = vadd.f32 0.0, %v681
        %v683 = vpop.f32.mrf.mxu0
        %684 = vmatprep.mubr.f32.mxu0 0.0
        %685 = vmatmul.mubr.f32.gmra.mxu0 %v565
        %v686 = vpop.f32.mrf.mxu0
        %v687 = vadd.f32 0.0, %v686
        %v688 = vpop.f32.mrf.mxu0
        %689 = vmatprep.mubr.f32.mxu0 0.0
        %690 = vmatmul.mubr.f32.gmra.mxu0 %v568
        %v691 = vpop.f32.mrf.mxu0
        %v692 = vadd.f32 0.0, %v691
        %v693 = vpop.f32.mrf.mxu0
        %694 = vmatprep.mubr.f32.mxu0 0.0
        %695 = vmatmul.mubr.f32.gmra.mxu0 %v571
        %v696 = vpop.f32.mrf.mxu0
        %v697 = vadd.f32 0.0, %v696
        %v698 = vpop.f32.mrf.mxu0
        %699 = vmatprep.mubr.f32.mxu0 0.0
        %700 = vmatmul.mubr.f32.gmra.mxu0 %v574
        %v701 = vpop.f32.mrf.mxu0
        %v702 = vadd.f32 0.0, %v701
        %v703 = vpop.f32.mrf.mxu0
        %704 = vmatprep.mubr.f32.mxu0 0.0
        %705 = vmatmul.mubr.f32.gmra.mxu0 %v577
        %v706 = vpop.f32.mrf.mxu0
        %v707 = vadd.f32 0.0, %v706
        %v708 = vpop.f32.mrf.mxu0
        %709 = vmatprep.mubr.f32.mxu0 0.0
        %710 = vmatmul.mubr.f32.gmra.mxu0 %v580
        %v711 = vpop.f32.mrf.mxu0
        %v712 = vadd.f32 0.0, %v711
        %v713 = vpop.f32.mrf.mxu0
        %714 = vmatprep.mubr.f32.mxu0 0.0
        %715 = vmatmul.mubr.f32.gmra.mxu0 %v583
        %v716 = vpop.f32.mrf.mxu0
        %v717 = vadd.f32 0.0, %v716
        %v718 = vpop.f32.mrf.mxu0
        %719 = vdwg.mxu0
        %720 = vmatprep.subr.mxu0 0.0
        %721 = vmatpush1.msra.mxu0 0.0
        %722 = vmatprep.subr.mxu0 0.0
        %723 = vmatpush1.msra.mxu0 0.0
        %724 = vmatprep.subr.mxu0 0.0
        %725 = vmatpush1.msra.mxu0 0.0
        %726 = vmatprep.subr.mxu0 0.0
        %727 = vmatpush1.msra.mxu0 0.0
        %728 = vmatprep.subr.mxu0 0.0
        %729 = vmatpush1.msra.mxu0 0.0
        %730 = vmatprep.subr.mxu0 0.0
        %731 = vmatpush1.msra.mxu0 0.0
        %732 = vmatprep.subr.mxu0 0.0
        %733 = vmatpush1.msra.mxu0 0.0
        %734 = vmatprep.subr.mxu0 0.0
        %735 = vmatpush1.msra.mxu0 0.0
        %736 = vmatprep.subr.mxu0 0.0
        %737 = vmatpush1.msra.mxu0 0.0
        %738 = vmatprep.subr.mxu0 0.0
        %739 = vmatpush1.msra.mxu0 0.0
        %740 = vmatprep.subr.mxu0 0.0
        %741 = vmatpush1.msra.mxu0 0.0
        %742 = vmatprep.subr.mxu0 0.0
        %743 = vmatpush1.msra.mxu0 0.0
        %744 = vmatprep.subr.mxu0 0.0
        %745 = vmatpush1.msra.mxu0 %v539
        %746 = vmatprep.subr.mxu0 0.0
        %747 = vmatpush1.msra.mxu0 %v534
        %748 = vmatprep.subr.mxu0 0.0
        %749 = vmatpush1.msra.mxu0 %v529
        %750 = vmatprep.subr.mxu0 0.0
        %751 = vmatpush1.msra.mxu0 %v524
        %752 = vmatprep.subr.mxu0 0.0
        %753 = vmatpush2.msra.mxu0 0.0
        %754 = vmatprep.subr.mxu0 0.0
        %755 = vmatpush2.msra.mxu0 0.0
        %756 = vmatprep.subr.mxu0 0.0
        %757 = vmatpush2.msra.mxu0 0.0
        %758 = vmatprep.subr.mxu0 0.0
        %759 = vmatpush2.msra.mxu0 0.0
        %760 = vmatprep.subr.mxu0 0.0
        %761 = vmatpush2.msra.mxu0 0.0
        %762 = vmatprep.subr.mxu0 0.0
        %763 = vmatpush2.msra.mxu0 0.0
        %764 = vmatprep.subr.mxu0 0.0
        %765 = vmatpush2.msra.mxu0 0.0
        %766 = vmatprep.subr.mxu0 0.0
        %767 = vmatpush2.msra.mxu0 0.0
        %768 = vmatprep.subr.mxu0 0.0
        %769 = vmatpush2.msra.mxu0 0.0
        %770 = vmatprep.subr.mxu0 0.0
        %771 = vmatpush2.msra.mxu0 0.0
        %772 = vmatprep.subr.mxu0 0.0
        %773 = vmatpush2.msra.mxu0 0.0
        %774 = vmatprep.subr.mxu0 0.0
        %775 = vmatpush2.msra.mxu0 0.0
        %776 = vmatprep.subr.mxu0 0.0
        %777 = vmatpush2.msra.mxu0 0.0
        %778 = vmatprep.subr.mxu0 0.0
        %779 = vmatpush2.msra.mxu0 0.0
        %780 = vmatprep.subr.mxu0 0.0
        %781 = vmatpush2.msra.mxu0 0.0
        %782 = vmatprep.subr.mxu0 0.0
        %783 = vmatpush2.msra.mxu0 0.0
        %784 = vmatprep.mubr.f32.mxu0 0.0
        %785 = vmatmul.mubr.f32.gmra.mxu0 %v544
        %v786 = vpop.f32.mrf.mxu0
        %v787 = vadd.f32 0.0, %v786
        %v788 = vpop.f32.mrf.mxu0
        %789 = vmatprep.mubr.f32.mxu0 0.0
        %790 = vmatmul.mubr.f32.gmra.mxu0 %v547
        %v791 = vpop.f32.mrf.mxu0
        %v792 = vadd.f32 0.0, %v791
        %v793 = vpop.f32.mrf.mxu0
        %794 = vmatprep.mubr.f32.mxu0 0.0
        %795 = vmatmul.mubr.f32.gmra.mxu0 %v550
        %v796 = vpop.f32.mrf.mxu0
        %v797 = vadd.f32 0.0, %v796
        %v798 = vpop.f32.mrf.mxu0
        %799 = vmatprep.mubr.f32.mxu0 0.0
        %800 = vmatmul.mubr.f32.gmra.mxu0 %v553
        %v801 = vpop.f32.mrf.mxu0
        %v802 = vadd.f32 0.0, %v801
        %v803 = vpop.f32.mrf.mxu0
        %804 = vmatprep.mubr.f32.mxu0 0.0
        %805 = vmatmul.mubr.f32.gmra.mxu0 %v556
        %v806 = vpop.f32.mrf.mxu0
        %v807 = vadd.f32 0.0, %v806
        %v808 = vpop.f32.mrf.mxu0
        %809 = vmatprep.mubr.f32.mxu0 0.0
        %810 = vmatmul.mubr.f32.gmra.mxu0 %v559
        %v811 = vpop.f32.mrf.mxu0
        %v812 = vadd.f32 0.0, %v811
        %v813 = vpop.f32.mrf.mxu0
        %814 = vmatprep.mubr.f32.mxu0 0.0
        %815 = vmatmul.mubr.f32.gmra.mxu0 %v562
        %v816 = vpop.f32.mrf.mxu0
        %v817 = vadd.f32 0.0, %v816
        %v818 = vpop.f32.mrf.mxu0
        %819 = vmatprep.mubr.f32.mxu0 0.0
        %820 = vmatmul.mubr.f32.gmra.mxu0 %v565
        %v821 = vpop.f32.mrf.mxu0
        %v822 = vadd.f32 0.0, %v821
        %v823 = vpop.f32.mrf.mxu0
        %824 = vmatprep.mubr.f32.mxu0 0.0
        %825 = vmatmul.mubr.f32.gmra.mxu0 %v568
        %v826 = vpop.f32.mrf.mxu0
        %v827 = vadd.f32 0.0, %v826
        %v828 = vpop.f32.mrf.mxu0
        %829 = vmatprep.mubr.f32.mxu0 0.0
        %830 = vmatmul.mubr.f32.gmra.mxu0 %v571
        %v831 = vpop.f32.mrf.mxu0
        %v832 = vadd.f32 0.0, %v831
        %v833 = vpop.f32.mrf.mxu0
        %834 = vmatprep.mubr.f32.mxu0 0.0
        %835 = vmatmul.mubr.f32.gmra.mxu0 %v574
        %v836 = vpop.f32.mrf.mxu0
        %v837 = vadd.f32 0.0, %v836
        %v838 = vpop.f32.mrf.mxu0
        %839 = vmatprep.mubr.f32.mxu0 0.0
        %840 = vmatmul.mubr.f32.gmra.mxu0 %v577
        %v841 = vpop.f32.mrf.mxu0
        %v842 = vadd.f32 0.0, %v841
        %v843 = vpop.f32.mrf.mxu0
        %844 = vmatprep.mubr.f32.mxu0 0.0
        %845 = vmatmul.mubr.f32.gmra.mxu0 %v580
        %v846 = vpop.f32.mrf.mxu0
        %v847 = vadd.f32 0.0, %v846
        %v848 = vpop.f32.mrf.mxu0
        %849 = vmatprep.mubr.f32.mxu0 0.0
        %850 = vmatmul.mubr.f32.gmra.mxu0 %v583
        %v851 = vpop.f32.mrf.mxu0
        %v852 = vadd.f32 0.0, %v851
        %v853 = vpop.f32.mrf.mxu0
        %854 = vdwg.mxu0
        %v855 = vlaneseq
        %v856 = vshrl.u32 %v855, 7
        %v857 = vsub.s32 0, %v856
        %v858 = vrot.slane %v293, %v857
        %vm859 = vcmp.eq.s32.totalorder %v295, %v858
        %v860 = vsel %vm859, 1, 0
        %v861 = vcvt.s32.f32 %v860
        %vm862 = vcmask 56320
        %v864 = vsel %vm862, %v289, 0
        %v867 = vsel %vm862, %v290, 0
        %vm869 = vcmask 1046528
        %v871 = vsel %vm869, %v861, 0
        %873 = vmatprep.subr.mxu0 0.0
        %874 = vmatpush1.msra.mxu0 0.0
        %875 = vmatprep.subr.mxu0 0.0
        %876 = vmatpush1.msra.mxu0 0.0
        %877 = vmatprep.subr.mxu0 0.0
        %878 = vmatpush1.msra.mxu0 0.0
        %879 = vmatprep.subr.mxu0 0.0
        %880 = vmatpush1.msra.mxu0 0.0
        %881 = vmatprep.subr.mxu0 0.0
        %882 = vmatpush1.msra.mxu0 0.0
        %883 = vmatprep.subr.mxu0 0.0
        %884 = vmatpush1.msra.mxu0 0.0
        %885 = vmatprep.subr.mxu0 0.0
        %886 = vmatpush1.msra.mxu0 0.0
        %887 = vmatprep.subr.mxu0 0.0
        %888 = vmatpush1.msra.mxu0 0.0
        %889 = vmatprep.subr.mxu0 0.0
        %890 = vmatpush1.msra.mxu0 0.0
        %891 = vmatprep.subr.mxu0 0.0
        %892 = vmatpush1.msra.mxu0 0.0
        %893 = vmatprep.subr.mxu0 0.0
        %894 = vmatpush1.msra.mxu0 0.0
        %895 = vmatprep.subr.mxu0 0.0
        %896 = vmatpush1.msra.mxu0 0.0
        %897 = vmatprep.subr.mxu0 0.0
        %898 = vmatpush1.msra.mxu0 0.0
        %899 = vmatprep.subr.mxu0 0.0
        %900 = vmatpush1.msra.mxu0 0.0
        %901 = vmatprep.subr.mxu0 0.0
        %902 = vmatpush1.msra.mxu0 0.0
        %903 = vmatprep.subr.mxu0 0.0
        %904 = vmatpush1.msra.mxu0 %v871
        %905 = vmatprep.subr.mxu0 0.0
        %906 = vmatpush2.msra.mxu0 0.0
        %907 = vmatprep.subr.mxu0 0.0
        %908 = vmatpush2.msra.mxu0 0.0
        %909 = vmatprep.subr.mxu0 0.0
        %910 = vmatpush2.msra.mxu0 0.0
        %911 = vmatprep.subr.mxu0 0.0
        %912 = vmatpush2.msra.mxu0 0.0
        %913 = vmatprep.subr.mxu0 0.0
        %914 = vmatpush2.msra.mxu0 0.0
        %915 = vmatprep.subr.mxu0 0.0
        %916 = vmatpush2.msra.mxu0 0.0
        %917 = vmatprep.subr.mxu0 0.0
        %918 = vmatpush2.msra.mxu0 0.0
        %919 = vmatprep.subr.mxu0 0.0
        %920 = vmatpush2.msra.mxu0 0.0
        %921 = vmatprep.subr.mxu0 0.0
        %922 = vmatpush2.msra.mxu0 0.0
        %923 = vmatprep.subr.mxu0 0.0
        %924 = vmatpush2.msra.mxu0 0.0
        %925 = vmatprep.subr.mxu0 0.0
        %926 = vmatpush2.msra.mxu0 0.0
        %927 = vmatprep.subr.mxu0 0.0
        %928 = vmatpush2.msra.mxu0 0.0
        %929 = vmatprep.subr.mxu0 0.0
        %930 = vmatpush2.msra.mxu0 0.0
        %931 = vmatprep.subr.mxu0 0.0
        %932 = vmatpush2.msra.mxu0 0.0
        %933 = vmatprep.subr.mxu0 0.0
        %934 = vmatpush2.msra.mxu0 0.0
        %935 = vmatprep.subr.mxu0 0.0
        %936 = vmatpush2.msra.mxu0 0.0
        %937 = vmatprep.mubr.f32.mxu0 0.0
        %938 = vmatmul.mubr.f32.gmra.mxu0 %v864
        %v939 = vpop.f32.mrf.mxu0
        %v940 = vadd.f32 0.0, %v939
        %v941 = vpop.f32.mrf.mxu0
        %942 = vmatprep.mubr.f32.mxu0 0.0
        %943 = vmatmul.mubr.f32.gmra.mxu0 %v867
        %v944 = vpop.f32.mrf.mxu0
        %v945 = vadd.f32 0.0, %v944
        %v946 = vpop.f32.mrf.mxu0
        %947 = vdwg.mxu0
        %v948 = vcombine.high %v861, %v861
        %v950 = vunpack.c.l.s4 1966171168
        %v951 = vunpack.c.0.s8 %v950
        %v952 = vlaneseq
        %v953 = vshrl.u32 %v952, 7
        %v954 = vsub.s32 %v951, %v953
        %v955 = vrot.slane %v861, %v954
        %v957 = vunpack.c.l.s4 1966171168
        %v958 = vunpack.c.0.s8 %v957
        %v959 = vlaneseq
        %v960 = vshrl.u32 %v959, 7
        %v961 = vsub.s32 %v958, %v960
        %v962 = vrot.slane %v948, %v961
        %v963 = vcombine.high %v955, %v955
        %v964 = vcombine.high %v962, %v962
        %v966 = vunpack.c.l.s4 1966171168
        %v967 = vunpack.c.0.s8 %v966
        %v968 = vlaneseq
        %v969 = vshrl.u32 %v968, 7
        %v970 = vsub.s32 %v967, %v969
        %v971 = vrot.slane %v955, %v970
        %v973 = vunpack.c.l.s4 1966171168
        %v974 = vunpack.c.0.s8 %v973
        %v975 = vlaneseq
        %v976 = vshrl.u32 %v975, 7
        %v977 = vsub.s32 %v974, %v976
        %v978 = vrot.slane %v962, %v977
        %v980 = vunpack.c.l.s4 1966171168
        %v981 = vunpack.c.0.s8 %v980
        %v982 = vlaneseq
        %v983 = vshrl.u32 %v982, 7
        %v984 = vsub.s32 %v981, %v983
        %v985 = vrot.slane %v963, %v984
        %v987 = vunpack.c.l.s4 1966171168
        %v988 = vunpack.c.0.s8 %v987
        %v989 = vlaneseq
        %v990 = vshrl.u32 %v989, 7
        %v991 = vsub.s32 %v988, %v990
        %v992 = vrot.slane %v964, %v991
        %v993 = vcombine.high %v971, %v971
        %v994 = vcombine.high %v978, %v978
        %v995 = vcombine.high %v985, %v985
        %v996 = vlaneseq
        %v997 = vshrl.u32 %v996, 7
        %v998 = vsub.s32 0, %v997
        %v999 = vrot.slane %v971, %v998
        %v1000 = vlaneseq
        %v1001 = vshrl.u32 %v1000, 7
        %v1002 = vsub.s32 0, %v1001
        %v1003 = vrot.slane %v985, %v1002
        %v1004 = vlaneseq
        %v1005 = vshrl.u32 %v1004, 7
        %v1006 = vsub.s32 0, %v1005
        %v1007 = vrot.slane %v993, %v1006
        %v1008 = vlaneseq
        %v1009 = vshrl.u32 %v1008, 7
        %v1010 = vsub.s32 0, %v1009
        %v1011 = vrot.slane %v995, %v1010
        %v1012 = vlaneseq
        %v1013 = vshrl.u32 %v1012, 7
        %v1014 = vsub.s32 0, %v1013
        %v1015 = vrot.slane %v978, %v1014
        %v1016 = vlaneseq
        %v1017 = vshrl.u32 %v1016, 7
        %v1018 = vsub.s32 0, %v1017
        %v1019 = vrot.slane %v992, %v1018
        %v1020 = vlaneseq
        %v1021 = vshrl.u32 %v1020, 7
        %v1022 = vsub.s32 0, %v1021
        %v1023 = vrot.slane %v994, %v1022
        %v1031 = vmul.f32 %v652, %v999
        %v1032 = vmul.f32 %v657, %v999
        %v1033 = vmul.f32 %v662, %v1003
        %v1034 = vmul.f32 %v667, %v1003
        %v1035 = vmul.f32 %v672, %v1007
        %v1036 = vmul.f32 %v677, %v1007
        %v1037 = vmul.f32 %v682, %v1011
        %v1038 = vmul.f32 %v687, %v1011
        %v1039 = vmul.f32 %v692, %v1015
        %v1040 = vmul.f32 %v697, %v1015
        %v1041 = vmul.f32 %v702, %v1019
        %v1042 = vmul.f32 %v707, %v1019
        %v1043 = vmul.f32 %v712, %v1023
        %v1044 = vmul.f32 %v717, %v1023
        %v1045 = vadd.f32 %v1031, %v1033
        %v1046 = vadd.f32 %v1045, %v1035
        %v1047 = vadd.f32 %v1046, %v1037
        %v1048 = vadd.f32 %v1047, %v1039
        %v1049 = vadd.f32 %v1048, %v1041
        %v1050 = vadd.f32 %v1049, %v1043
        %v1051 = vadd.f32 %v1032, %v1034
        %v1052 = vadd.f32 %v1051, %v1036
        %v1053 = vadd.f32 %v1052, %v1038
        %v1054 = vadd.f32 %v1053, %v1040
        %v1055 = vadd.f32 %v1054, %v1042
        %v1056 = vadd.f32 %v1055, %v1044
        %v1057 = vmul.f32 %v787, %v999
        %v1058 = vmul.f32 %v792, %v999
        %v1059 = vmul.f32 %v797, %v1003
        %v1060 = vmul.f32 %v802, %v1003
        %v1061 = vmul.f32 %v807, %v1007
        %v1062 = vmul.f32 %v812, %v1007
        %v1063 = vmul.f32 %v817, %v1011
        %v1064 = vmul.f32 %v822, %v1011
        %v1065 = vmul.f32 %v827, %v1015
        %v1066 = vmul.f32 %v832, %v1015
        %v1067 = vmul.f32 %v837, %v1019
        %v1068 = vmul.f32 %v842, %v1019
        %v1069 = vmul.f32 %v847, %v1023
        %v1070 = vmul.f32 %v852, %v1023
        %v1071 = vadd.f32 %v1057, %v1059
        %v1072 = vadd.f32 %v1071, %v1061
        %v1073 = vadd.f32 %v1072, %v1063
        %v1074 = vadd.f32 %v1073, %v1065
        %v1075 = vadd.f32 %v1074, %v1067
        %v1076 = vadd.f32 %v1075, %v1069
        %v1077 = vadd.f32 %v1058, %v1060
        %v1078 = vadd.f32 %v1077, %v1062
        %v1079 = vadd.f32 %v1078, %v1064
        %v1080 = vadd.f32 %v1079, %v1066
        %v1081 = vadd.f32 %v1080, %v1068
        %v1082 = vadd.f32 %v1081, %v1070
        %v1083 = vmul.f32 %v1050, %v1050
        %v1084 = vmul.f32 %v1056, %v1056
        %v1085 = vadd.f32 %v1083, %v1084
        %v1086 = vrot.slane %v1085, 4
        %v1087 = vadd.f32 %v1085, %v1086
        %v1088 = vrot.slane %v1087, 2
        %v1089 = vadd.f32 %v1087, %v1088
        %v1090 = vrot.slane %v1089, 1
        %v1091 = vadd.f32 %v1089, %v1090
        %v1092 = vmax.f32 %v1091, 1e-24
        %v1093 = vrsqrt.pop %v1092
        %v1094 = vmul.f32 %v1050, %v1093
        %v1095 = vmul.f32 %v1056, %v1093
        %v1096 = vadd.f32 %v1094, %v940
        %v1097 = vadd.f32 %v1095, %v945
        %v1098 = vmul.f32 %v1076, %v1076
        %v1099 = vmul.f32 %v1082, %v1082
        %v1100 = vadd.f32 %v1098, %v1099
        %v1101 = vrot.slane %v1100, 4
        %v1102 = vadd.f32 %v1100, %v1101
        %v1103 = vrot.slane %v1102, 2
        %v1104 = vadd.f32 %v1102, %v1103
        %v1105 = vrot.slane %v1104, 1
        %v1106 = vadd.f32 %v1104, %v1105
        %v1107 = vmax.f32 %v1106, 1e-24
        %v1108 = vrsqrt.pop %v1107
        %v1109 = vmul.f32 %v1076, %v1108
        %v1110 = vmul.f32 %v1082, %v1108
        %v1111 = vsub.f32 %v1096, %v1109
        %v1112 = vsub.f32 %v1097, %v1110
        %v1113 = vmul.f32 %v1111, %v1111
        %v1114 = vmul.f32 %v1112, %v1112
        %v1115 = vadd.f32 %v1113, %v1114
        %v1116 = vrot.slane %v1115, 4
        %v1117 = vadd.f32 %v1115, %v1116
        %v1118 = vrot.slane %v1117, 2
        %v1119 = vadd.f32 %v1117, %v1118
        %v1120 = vrot.slane %v1119, 1
        %v1121 = vadd.f32 %v1119, %v1120
        %v1122 = vrsqrt.pop %v1121
        %v1123 = vmul.f32 %v1121, %v1122
        %vm1124 = vcmp.eq.f32.partialorder %v1121, inf
        %v1125 = vsel %vm1124, %v1121, %v1123
        %vm1126 = vcmp.eq.f32.partialorder %v1121, 0.0
        %v1127 = vand.u32 %v1121, 2147483648
        %v1128 = vsel %vm1126, %v1127, %v1125
        %1129 = vst [vmem:[%s261] sm:$0x1] %v1128
        %s1130 = sand.u32 %s169, 1
        %s1131 = scalar_lea.sflag [#allocation3], %s1130
        %s1132 = sand.u32 %s169, 1
        %s1133 = scalar_lea.vmem [#allocation2], %s1132
        // Predicated region
        $region45: #{tpu_custom_call.1} parent=43 // pred_check
          %p1134 = pneg %p179
        $region46: #{tpu_custom_call.1} parent=43 // pred_check_branch
          %1136 = sbr.rel (%p1134) target = $region48
        $region47: #{tpu_custom_call.1} parent=43 // pred_region
          %s1138 = ssub.s32 16, 16
          %1139 = vsyncadd %s1131, %s1138
          %s1140 = smul.addr %s20, 16
          %s1141 = scalar_lea.hbm %s6, %s1140
          %s1143 = sshll.u32 %s1133, 4
          %s1144 = int_to_ptr.vmem [resolvable:$true] %s1143
          %1146 = dma.vmem_to_hbm [thread:$0]  %s1144, 16, %s1141, %s1131
        $region48: #{tpu_custom_call.1} parent=43 // pred_fallthru
          _
      $region44: #{tpu_custom_call.1} parent=5 // pred_fallthru
        _
      %p1147 = scmp.le.s32.totalorder 2, %s15
      // Predicated region
      $region49: #{tpu_custom_call.1} parent=5 // pred_check
        %p1148 = pneg %p1147
      $region50: #{tpu_custom_call.1} parent=5 // pred_check_branch
        %1150 = sbr.rel (%p1148) target = $region52
      $region51: #{tpu_custom_call.1} parent=5 // pred_region
        %s1151 = ssub.s32 %s15, 2
        // Predicated region
        $region53: #{tpu_custom_call.1} parent=51 // pred_check
          %p1152 = pneg %p185
        $region54: #{tpu_custom_call.1} parent=51 // pred_check_branch
          %1154 = sbr.rel (%p1152) target = $region56
        $region55: #{tpu_custom_call.1} parent=51 // pred_region
          %s1155 = sand.u32 %s170, 1
          %s1156 = scalar_lea.sflag [#allocation3], %s1155
          %s1157 = sand.u32 %s170, 1
          %s1158 = scalar_lea.vmem [#allocation2], %s1157
          %1159 = dma.done %s1156, 16
        $region56: #{tpu_custom_call.1} parent=51 // pred_fallthru
          _
      $region52: #{tpu_custom_call.1} parent=5 // pred_fallthru
        _
    $region6: #{tpu_custom_call.1} parent=1 // loop_footer
      %s19 = sadd.s32 1, %s15
    $region7: #{tpu_custom_call.1} parent=1 // loop_footer_branch
      %14 = sbr.rel target = $region3
    $region8: #{tpu_custom_call.1} parent=1 // loop_exit
      _
    %1160 = vsyncpa [#allocation3], 1
    %s1161 = scalar_lea.sflag [#allocation3], 1
    %1162 = vsyncpa %s1161, 1

</llo_original>
